<compile_context>
chip_gen: v7x
topology: tpu7x:2x2x1
jax: 0.10.0
libtpu: 0.0.40
codegen_flags: <defaults>
</compile_context>

<pallas_src>
import jax
import jax.numpy as jnp
from jax.experimental import pallas as pl
from jax.experimental.pallas import tpu as pltpu


def _round_up(a: int, b: int) -> int:
    return ((a + b - 1) // b) * b


def _attention_block_kernel(x_ref, wqk_ref, bqk_ref, wn_ref, bn_ref,
                            wo_ref, bo_ref, o_ref):
    """One grid step: a (tile_m, D) tile of rows through the whole block."""
    x = x_ref[...]                    # f32; also serves as V and the residual
    D = x.shape[1]

    # Fused Q|K projection: one (D, 2D) matmul instead of two (D, D) matmuls.
    qk = jnp.dot(x, wqk_ref[...], preferred_element_type=jnp.float32)
    qk = jnp.maximum(qk + bqk_ref[...], 0.0)   # relu(query(x)) | relu(key(x))

    # attention_weights = sigmoid(Q + K); out = weights * V  (V = x)
    attn_w = jax.nn.sigmoid(qk[:, :D] + qk[:, D:])
    out = attn_w * x

    # attention_weights2 = sigmoid(relu(nnout(out)))
    nn_out = jnp.dot(out, wn_ref[...],
                     preferred_element_type=jnp.float32) + bn_ref[...]
    attn_w2 = jax.nn.sigmoid(jnp.maximum(nn_out, 0.0))

    # F2 = x + weights2 * out ; y = output_linear(F2)
    f2 = x + attn_w2 * out
    y = jnp.dot(f2, wo_ref[...], preferred_element_type=jnp.float32) + bo_ref[...]
    o_ref[...] = y.astype(o_ref.dtype)


def prepare_params(params):
    """One-time weight prep (hoisted out of the per-forward path).

    Fuses query/key weights into a single (D, 2D) matrix.  All tensors stay
    f32: the kernel is HBM-bound, so f32 MXU operands cost nothing.
    """
    wqk = jnp.concatenate([params["wq"], params["wk"]], axis=1)
    bqk = jnp.concatenate([params["bq"], params["bk"]], axis=1)
    return dict(wqk=wqk, bqk=bqk,
                wn=params["wn"], bn=params["bn"],
                wo=params["wo"], bo=params["bo"])


def attention_block_t(x, prep, *, tile_m=None):
    """Pallas forward of AttentionBlock_t.

    x: (N, D) float32
    prep: output of prepare_params (fused, pre-transposed weights).
    """
    N, D = x.shape
    out_dim = prep["wo"].shape[1]

    # Minimal sublane padding only (<= 7 rows); grid handles ragged tail.
    n8 = _round_up(N, 8)
    x_in = x if n8 == N else jnp.pad(x, ((0, n8 - N), (0, 0)))

    # Row tile: as large as possible (amortize per-step pipeline overhead) while
    # keeping >=2 grid steps whenever N allows it, so v7x megacore sharding via
    # "parallel" semantics actually has work for both TensorCores.
    MAX_TILE = 2048
    if tile_m is None:
        tile_m = min(MAX_TILE, _round_up(max(pl.cdiv(n8, 2), 8), 8))
    tile_m = _round_up(min(tile_m, n8), 8)
    grid = (pl.cdiv(n8, tile_m),)

    # Grid-invariant operands: constant index_map + single buffer (VMEM saver).
    def const_spec(shape):
        return pl.BlockSpec(shape, lambda i: (0, 0),
                            pipeline_mode=pl.Buffered(buffer_count=1))

    wqk, bqk = prep["wqk"], prep["bqk"]
    wn, bn = prep["wn"], prep["bn"]
    wo, bo = prep["wo"], prep["bo"]

    flops = 2 * n8 * D * (2 * D + D + out_dim)
    transcendentals = 2 * n8 * D                       # two sigmoids per element
    bytes_accessed = (n8 * D * 4 + n8 * out_dim * 4
                      + 4 * (wqk.size + wn.size + wo.size
                             + bqk.size + bn.size + bo.size))

    y = pl.pallas_call(
        _attention_block_kernel,
        out_shape=jax.ShapeDtypeStruct((n8, out_dim), x.dtype),
        grid_spec=pltpu.PrefetchScalarGridSpec(
            num_scalar_prefetch=0,
            grid=grid,
            in_specs=[
                pl.BlockSpec((tile_m, D), lambda i: (i, 0)),       # x tile
                const_spec((D, 2 * D)), const_spec((1, 2 * D)),    # fused q|k W, b
                const_spec((D, D)), const_spec((1, D)),            # nnout W, b
                const_spec((D, out_dim)), const_spec((1, out_dim)),  # output W, b
            ],
            out_specs=pl.BlockSpec((tile_m, out_dim), lambda i: (i, 0)),
        ),
        compiler_params=pltpu.CompilerParams(
            dimension_semantics=("parallel",)),
        cost_estimate=pl.CostEstimate(
            flops=flops,
            transcendentals=transcendentals,
            bytes_accessed=bytes_accessed),
    )(x_in, wqk, bqk, wn, bn, wo, bo)

    return y if n8 == N else y[:N]


def init_params(key, input_output_dim, input_dim):
    """Deterministic init mimicking nn.Linear default (uniform +/- 1/sqrt(fan_in)).

    Weights are stored pre-transposed as (in_features, out_features);
    biases as (1, out_features).
    """
    def linear(k, fan_in, fan_out):
        kw, kb = jax.random.split(k)
        bound = 1.0 / jnp.sqrt(fan_in)
        w = jax.random.uniform(kw, (fan_in, fan_out), jnp.float32, -bound, bound)
        b = jax.random.uniform(kb, (1, fan_out), jnp.float32, -bound, bound)
        return w, b

    kq, kk, kn, ko = jax.random.split(key, 4)
    wq, bq = linear(kq, input_output_dim, input_output_dim)
    wk, bk = linear(kk, input_output_dim, input_output_dim)
    wn, bn = linear(kn, input_output_dim, input_output_dim)
    wo, bo = linear(ko, input_output_dim, input_dim)
    return dict(wq=wq, bq=bq, wk=wk, bk=bk, wn=wn, bn=bn, wo=wo, bo=bo)


def reference_forward(x, p):
    """Plain-JAX f32 reference matching the PyTorch forward exactly."""
    q = jax.nn.relu(x @ p["wq"] + p["bq"])
    k = jax.nn.relu(x @ p["wk"] + p["bk"])
    attn_w = jax.nn.sigmoid(q + k)
    out = attn_w * x
    attn_w2 = jax.nn.sigmoid(jax.nn.relu(out @ p["wn"] + p["bn"]))
    f2 = x + attn_w2 * out
    return f2 @ p["wo"] + p["bo"]


if __name__ == "__main__":
    # Small shapes consistent with the module: N rows of hidden size D,
    # projected down to input_dim by output_linear.
    N = 8            # batch of rows (seq)
    D = 32           # input_output_dim (hidden)
    INPUT_DIM = 16   # input_dim (output of output_linear)

    key = jax.random.PRNGKey(0)
    kx, kp = jax.random.split(key)
    x = jax.random.normal(kx, (N, D), dtype=jnp.float32)
    params = init_params(kp, D, INPUT_DIM)
    prep = prepare_params(params)   # one-time weight fusion, outside the forward

    y = jax.block_until_ready(attention_block_t(x, prep))
    y_ref = reference_forward(x, params)
    assert y.shape == (N, INPUT_DIM)
    # f32 MXU operands with f32 accumulation => tight tolerance vs. reference.
    assert jnp.allclose(y, y_ref, atol=2e-2, rtol=2e-2)

    # Larger, awkward N: exercises the minimal (to-8) padding + ragged final
    # block, a 2-step grid (megacore sharding on v7x) and unpadded 16-lane
    # output stores.
    N2 = 1050
    x2 = jax.random.normal(jax.random.PRNGKey(1), (N2, D), dtype=jnp.float32)
    y2 = jax.block_until_ready(attention_block_t(x2, prep))
    y2_ref = reference_forward(x2, params)
    assert y2.shape == (N2, INPUT_DIM)
    assert jnp.allclose(y2, y2_ref, atol=2e-2, rtol=2e-2)

    print("KERNEL_OK")
</pallas_src>

<mosaic_0001>
module attributes {stable_mosaic.version = 11 : i64} {
  func.func @_attention_block_kernel(%arg0: i32, %arg1: memref<8x32xf32, #tpu.memory_space<vmem>>, %arg2: memref<32x64xf32, #tpu.memory_space<vmem>>, %arg3: memref<1x64xf32, #tpu.memory_space<vmem>>, %arg4: memref<32x32xf32, #tpu.memory_space<vmem>>, %arg5: memref<1x32xf32, #tpu.memory_space<vmem>>, %arg6: memref<32x16xf32, #tpu.memory_space<vmem>>, %arg7: memref<1x16xf32, #tpu.memory_space<vmem>>, %arg8: memref<8x16xf32, #tpu.memory_space<vmem>>) attributes {dimension_semantics = [#tpu.dimension_semantics<parallel>], iteration_bounds = array<i64: 1>, scalar_prefetch = 0 : i64, scratch_operands = 0 : i64, tpu.core_type = #tpu.core_type<tc>, window_params = [{transform_indices = @transform_0, window_bounds = array<i64: 8, 32>}, {pipeline_mode = #tpu.pipeline_mode<synchronous>, transform_indices = @transform_1, window_bounds = array<i64: 32, 64>}, {pipeline_mode = #tpu.pipeline_mode<synchronous>, transform_indices = @transform_2, window_bounds = array<i64: 1, 64>}, {pipeline_mode = #tpu.pipeline_mode<synchronous>, transform_indices = @transform_3, window_bounds = array<i64: 32, 32>}, {pipeline_mode = #tpu.pipeline_mode<synchronous>, transform_indices = @transform_4, window_bounds = array<i64: 1, 32>}, {pipeline_mode = #tpu.pipeline_mode<synchronous>, transform_indices = @transform_5, window_bounds = array<i64: 32, 16>}, {pipeline_mode = #tpu.pipeline_mode<synchronous>, transform_indices = @transform_6, window_bounds = array<i64: 1, 16>}, {transform_indices = @transform_7, window_bounds = array<i64: 8, 16>}]} {
    %c0 = arith.constant 0 : index
    %c0_0 = arith.constant 0 : index
    %0 = vector.load %arg1[%c0, %c0_0] : memref<8x32xf32, #tpu.memory_space<vmem>>, vector<8x32xf32>
    %c0_1 = arith.constant 0 : index
    %c0_2 = arith.constant 0 : index
    %1 = vector.load %arg2[%c0_1, %c0_2] : memref<32x64xf32, #tpu.memory_space<vmem>>, vector<32x64xf32>
    %cst = arith.constant dense<0.000000e+00> : vector<8x64xf32>
    %2 = tpu.matmul %0, %1, %cst {dimension_numbers = #tpu.dot_dimension_numbers<[1], [0], [0], [1], [0, 0, 1, 1], [], []>} : vector<8x32xf32>, vector<32x64xf32>, vector<8x64xf32> -> vector<8x64xf32>
    %c0_3 = arith.constant 0 : index
    %c0_4 = arith.constant 0 : index
    %3 = vector.load %arg3[%c0_3, %c0_4] : memref<1x64xf32, #tpu.memory_space<vmem>>, vector<1x64xf32>
    %4 = vector.broadcast %3 : vector<1x64xf32> to vector<8x64xf32>
    %5 = arith.addf %2, %4 : vector<8x64xf32>
    %cst_5 = arith.constant 0.000000e+00 : f32
    %6 = vector.broadcast %cst_5 : f32 to vector<8x64xf32>
    %7 = arith.maximumf %5, %6 : vector<8x64xf32>
    %8 = vector.extract_strided_slice %7 {offsets = [0, 0], sizes = [8, 32], strides = [1, 1]} : vector<8x64xf32> to vector<8x32xf32>
    %9 = vector.extract_strided_slice %7 {offsets = [0, 32], sizes = [8, 32], strides = [1, 1]} : vector<8x64xf32> to vector<8x32xf32>
    %10 = arith.addf %8, %9 : vector<8x32xf32>
    %11 = arith.negf %10 : vector<8x32xf32>
    %12 = math.exp %11 : vector<8x32xf32>
    %cst_6 = arith.constant 1.000000e+00 : f32
    %13 = vector.broadcast %cst_6 : f32 to vector<8x32xf32>
    %14 = arith.addf %13, %12 : vector<8x32xf32>
    %15 = arith.divf %13, %14 : vector<8x32xf32>
    %16 = arith.mulf %15, %0 : vector<8x32xf32>
    %c0_7 = arith.constant 0 : index
    %c0_8 = arith.constant 0 : index
    %17 = vector.load %arg4[%c0_7, %c0_8] : memref<32x32xf32, #tpu.memory_space<vmem>>, vector<32x32xf32>
    %cst_9 = arith.constant dense<0.000000e+00> : vector<8x32xf32>
    %18 = tpu.matmul %16, %17, %cst_9 {dimension_numbers = #tpu.dot_dimension_numbers<[1], [0], [0], [1], [0, 0, 1, 1], [], []>} : vector<8x32xf32>, vector<32x32xf32>, vector<8x32xf32> -> vector<8x32xf32>
    %c0_10 = arith.constant 0 : index
    %c0_11 = arith.constant 0 : index
    %19 = vector.load %arg5[%c0_10, %c0_11] : memref<1x32xf32, #tpu.memory_space<vmem>>, vector<1x32xf32>
    %20 = vector.broadcast %19 : vector<1x32xf32> to vector<8x32xf32>
    %21 = arith.addf %18, %20 : vector<8x32xf32>
    %cst_12 = arith.constant 0.000000e+00 : f32
    %22 = vector.broadcast %cst_12 : f32 to vector<8x32xf32>
    %23 = arith.maximumf %21, %22 : vector<8x32xf32>
    %24 = arith.negf %23 : vector<8x32xf32>
    %25 = math.exp %24 : vector<8x32xf32>
    %cst_13 = arith.constant 1.000000e+00 : f32
    %26 = vector.broadcast %cst_13 : f32 to vector<8x32xf32>
    %27 = arith.addf %26, %25 : vector<8x32xf32>
    %28 = arith.divf %26, %27 : vector<8x32xf32>
    %29 = arith.mulf %28, %16 : vector<8x32xf32>
    %30 = arith.addf %0, %29 : vector<8x32xf32>
    %c0_14 = arith.constant 0 : index
    %c0_15 = arith.constant 0 : index
    %31 = vector.load %arg6[%c0_14, %c0_15] : memref<32x16xf32, #tpu.memory_space<vmem>>, vector<32x16xf32>
    %cst_16 = arith.constant dense<0.000000e+00> : vector<8x16xf32>
    %32 = tpu.matmul %30, %31, %cst_16 {dimension_numbers = #tpu.dot_dimension_numbers<[1], [0], [0], [1], [0, 0, 1, 1], [], []>} : vector<8x32xf32>, vector<32x16xf32>, vector<8x16xf32> -> vector<8x16xf32>
    %c0_17 = arith.constant 0 : index
    %c0_18 = arith.constant 0 : index
    %33 = vector.load %arg7[%c0_17, %c0_18] : memref<1x16xf32, #tpu.memory_space<vmem>>, vector<1x16xf32>
    %34 = vector.broadcast %33 : vector<1x16xf32> to vector<8x16xf32>
    %35 = arith.addf %32, %34 : vector<8x16xf32>
    %c0_19 = arith.constant 0 : index
    %c0_20 = arith.constant 0 : index
    %36 = vector.load %arg8[%c0_19, %c0_20] : memref<8x16xf32, #tpu.memory_space<vmem>>, vector<8x16xf32>
    tpu.vector_store %arg8[%c0_19, %c0_20], %35 {strides = array<i32>} : memref<8x16xf32, #tpu.memory_space<vmem>>, vector<8x16xf32>,
    return
  }
  func.func @transform_0(%arg0: i32) -> (i32, i32) {
    %c0_i32 = arith.constant 0 : i32
    %c0_i32_0 = arith.constant 0 : i32
    return %arg0, %c0_i32 : i32, i32
  }
  func.func @transform_1(%arg0: i32) -> (i32, i32) {
    %c0_i32 = arith.constant 0 : i32
    %c0_i32_0 = arith.constant 0 : i32
    %c0_i32_1 = arith.constant 0 : i32
    return %c0_i32, %c0_i32_0 : i32, i32
  }
  func.func @transform_2(%arg0: i32) -> (i32, i32) {
    %c0_i32 = arith.constant 0 : i32
    %c0_i32_0 = arith.constant 0 : i32
    %c0_i32_1 = arith.constant 0 : i32
    return %c0_i32, %c0_i32_0 : i32, i32
  }
  func.func @transform_3(%arg0: i32) -> (i32, i32) {
    %c0_i32 = arith.constant 0 : i32
    %c0_i32_0 = arith.constant 0 : i32
    %c0_i32_1 = arith.constant 0 : i32
    return %c0_i32, %c0_i32_0 : i32, i32
  }
  func.func @transform_4(%arg0: i32) -> (i32, i32) {
    %c0_i32 = arith.constant 0 : i32
    %c0_i32_0 = arith.constant 0 : i32
    %c0_i32_1 = arith.constant 0 : i32
    return %c0_i32, %c0_i32_0 : i32, i32
  }
  func.func @transform_5(%arg0: i32) -> (i32, i32) {
    %c0_i32 = arith.constant 0 : i32
    %c0_i32_0 = arith.constant 0 : i32
    %c0_i32_1 = arith.constant 0 : i32
    return %c0_i32, %c0_i32_0 : i32, i32
  }
  func.func @transform_6(%arg0: i32) -> (i32, i32) {
    %c0_i32 = arith.constant 0 : i32
    %c0_i32_0 = arith.constant 0 : i32
    %c0_i32_1 = arith.constant 0 : i32
    return %c0_i32, %c0_i32_0 : i32, i32
  }
  func.func @transform_7(%arg0: i32) -> (i32, i32) {
    %c0_i32 = arith.constant 0 : i32
    %c0_i32_0 = arith.constant 0 : i32
    return %arg0, %c0_i32 : i32, i32
  }
}

</mosaic_0001>

<llo_original>
// kernel: tpu_custom_call.1
$region0: #{tpu_custom_call.1}
  #allocation0 [shape = 'u32[]', space=smem, size = 0x4, offset = 0x4, fixed_abs, tag = 'smem constant byte address 0x4 - core index']
  #allocation1 [shape = 'u32[144,128]{1,0:T(1,128)}', space=vmem, size = 0x12000, scoped, tag = 'internal scratch']
  %s0 = inlined_call_operand.vmem [shape: f32[8,32], index: 0, kind: input, shape index: {}]
  %s1 = inlined_call_operand.vmem [shape: f32[32,64], index: 1, kind: input, shape index: {}]
  %s2 = inlined_call_operand.vmem [shape: f32[1,64], index: 2, kind: input, shape index: {}]
  %s3 = inlined_call_operand.hbm [shape: f32[32,32], index: 3, kind: input, shape index: {}]
  %s4 = inlined_call_operand.vmem [shape: f32[1,32], index: 4, kind: input, shape index: {}]
  %s5 = inlined_call_operand.vmem [shape: f32[32,16], index: 5, kind: input, shape index: {}]
  %s6 = inlined_call_operand.vmem [shape: f32[1,16], index: 6, kind: input, shape index: {}]
  %s7 = inlined_call_operand.hbm [shape: f32[8,16], index: 7, kind: output, shape index: {}]
  %s8 = sld [smem:[#allocation0]]
  $region42: #{tpu_custom_call.1} parent=0
    _
  %s10 = ssub.s32 1, %s8
  %s11 = scalar_select 0, %s10, %s8
  $region1: #{tpu_custom_call.1} parent=0
    #allocation2 [shape = 'u8[16384]{0}', space=vmem, size = 0x4000, scoped, tag = 'input window, operand 3, single buffered']
    #allocation3 [shape = 's32[1]{0}', space=sflag, size = 0x4, scoped, tag = 'scoped memory for tpu_custom_call.1']
    #allocation4 [shape = 's32[1]{0}', space=sflag, size = 0x4, scoped, tag = 'scoped memory for tpu_custom_call.1']
    #allocation5 [shape = 'u8[4096]{0}', space=vmem, size = 0x1000, scoped, tag = 'output window, operand 0, single buffered']
    %12 = vsyncpa [#allocation3], 0
    %13 = vsyncpa [#allocation4], 0
    // Predicated region
    $region2: #{tpu_custom_call.1} parent=1 // pred_check
      _
    $region3: #{tpu_custom_call.1} parent=1 // pred_check_branch
      %15 = sbr.rel (0) target = $region5
    $region4: #{tpu_custom_call.1} parent=1 // pred_region
      _
    $region5: #{tpu_custom_call.1} parent=1 // pred_fallthru
      _
    // Predicated region
    $region6: #{tpu_custom_call.1} parent=1 // pred_check
      _
    $region7: #{tpu_custom_call.1} parent=1 // pred_check_branch
      %17 = sbr.rel (0) target = $region9
    $region8: #{tpu_custom_call.1} parent=1 // pred_region
      _
    $region9: #{tpu_custom_call.1} parent=1 // pred_fallthru
      _
    // Predicated region
    $region10: #{tpu_custom_call.1} parent=1 // pred_check
      _
    $region11: #{tpu_custom_call.1} parent=1 // pred_check_branch
      %19 = sbr.rel (0) target = $region13
    $region12: #{tpu_custom_call.1} parent=1 // pred_region
      _
    $region13: #{tpu_custom_call.1} parent=1 // pred_fallthru
      _
    // Predicated region
    $region14: #{tpu_custom_call.1} parent=1 // pred_check
      _
    $region15: #{tpu_custom_call.1} parent=1 // pred_check_branch
      %21 = sbr.rel (0) target = $region17
    $region16: #{tpu_custom_call.1} parent=1 // pred_region
      %s23 = ssub.s32 512, 512
      %24 = vsyncadd [#allocation3], %s23
      %s25 = sshll.u32 [#allocation2], 4
      %s26 = int_to_ptr.vmem [resolvable:$true] %s25
      %31 = dma.hbm_to_vmem [thread:$0]  %s3, 512, %s26, [#allocation3], 128, 128, 8
    $region17: #{tpu_custom_call.1} parent=1 // pred_fallthru
      _
    // Predicated region
    $region18: #{tpu_custom_call.1} parent=1 // pred_check
      _
    $region19: #{tpu_custom_call.1} parent=1 // pred_check_branch
      %33 = sbr.rel (0) target = $region21
    $region20: #{tpu_custom_call.1} parent=1 // pred_region
      _
    $region21: #{tpu_custom_call.1} parent=1 // pred_fallthru
      _
    // Predicated region
    $region22: #{tpu_custom_call.1} parent=1 // pred_check
      _
    $region23: #{tpu_custom_call.1} parent=1 // pred_check_branch
      %35 = sbr.rel (0) target = $region25
    $region24: #{tpu_custom_call.1} parent=1 // pred_region
      _
    $region25: #{tpu_custom_call.1} parent=1 // pred_fallthru
      _
    // Predicated region
    $region26: #{tpu_custom_call.1} parent=1 // pred_check
      _
    $region27: #{tpu_custom_call.1} parent=1 // pred_check_branch
      %37 = sbr.rel (0) target = $region29
    $region28: #{tpu_custom_call.1} parent=1 // pred_region
      _
    $region29: #{tpu_custom_call.1} parent=1 // pred_fallthru
      _
    // Predicated region
    $region30: #{tpu_custom_call.1} parent=1 // pred_check
      _
    $region31: #{tpu_custom_call.1} parent=1 // pred_check_branch
      %39 = sbr.rel (0) target = $region33
    $region32: #{tpu_custom_call.1} parent=1 // pred_region
      %40 = dma.done [#allocation3], 512
    $region33: #{tpu_custom_call.1} parent=1 // pred_fallthru
      _
    %v41 = vld [vmem:[%s0] sm:$0xff]
    %v42 = vld [vmem:[%s1] sm:$0xff]
    %v43 = vld [vmem:[%s1 + $0x8] sm:$0xff]
    %v44 = vld [vmem:[%s1 + $0x10] sm:$0xff]
    %v45 = vld [vmem:[%s1 + $0x18] sm:$0xff]
    %v46 = vld [vmem:[%s2] sm:$0x1]
    %v48 = vlaneseq
    %v49 = vshrl.u32 %v48, 7
    %v50 = vsub.s32 0, %v49
    %v51 = vrot.slane %v46, %v50
    %vm53 = vcmask 261120
    %v55 = vsel %vm53, %v41, 0
    %57 = vmatprep.subr.mxu0 0.0
    %58 = vmatpush1.msra.mxu0 %v42
    %59 = vmatprep.subr.mxu0 0.0
    %60 = vmatpush1.msra.mxu0 %v43
    %61 = vmatprep.subr.mxu0 0.0
    %62 = vmatpush1.msra.mxu0 %v44
    %63 = vmatprep.subr.mxu0 0.0
    %64 = vmatpush1.msra.mxu0 %v45
    %65 = vmatprep.subr.mxu0 0.0
    %66 = vmatpush1.msra.mxu0 0.0
    %67 = vmatprep.subr.mxu0 0.0
    %68 = vmatpush1.msra.mxu0 0.0
    %69 = vmatprep.subr.mxu0 0.0
    %70 = vmatpush1.msra.mxu0 0.0
    %71 = vmatprep.subr.mxu0 0.0
    %72 = vmatpush1.msra.mxu0 0.0
    %73 = vmatprep.subr.mxu0 0.0
    %74 = vmatpush1.msra.mxu0 0.0
    %75 = vmatprep.subr.mxu0 0.0
    %76 = vmatpush1.msra.mxu0 0.0
    %77 = vmatprep.subr.mxu0 0.0
    %78 = vmatpush1.msra.mxu0 0.0
    %79 = vmatprep.subr.mxu0 0.0
    %80 = vmatpush1.msra.mxu0 0.0
    %81 = vmatprep.subr.mxu0 0.0
    %82 = vmatpush1.msra.mxu0 0.0
    %83 = vmatprep.subr.mxu0 0.0
    %84 = vmatpush1.msra.mxu0 0.0
    %85 = vmatprep.subr.mxu0 0.0
    %86 = vmatpush1.msra.mxu0 0.0
    %87 = vmatprep.subr.mxu0 0.0
    %88 = vmatpush1.msra.mxu0 0.0
    %89 = vmatprep.subr.mxu0 0.0
    %90 = vmatpush1.msra.mxu0 0.0
    %91 = vmatprep.subr.mxu0 0.0
    %92 = vmatpush1.msra.mxu0 0.0
    %93 = vmatprep.subr.mxu0 0.0
    %94 = vmatpush1.msra.mxu0 0.0
    %95 = vmatprep.subr.mxu0 0.0
    %96 = vmatpush1.msra.mxu0 0.0
    %97 = vmatprep.subr.mxu0 0.0
    %98 = vmatpush1.msra.mxu0 0.0
    %99 = vmatprep.subr.mxu0 0.0
    %100 = vmatpush1.msra.mxu0 0.0
    %101 = vmatprep.subr.mxu0 0.0
    %102 = vmatpush1.msra.mxu0 0.0
    %103 = vmatprep.subr.mxu0 0.0
    %104 = vmatpush1.msra.mxu0 0.0
    %105 = vmatprep.subr.mxu0 0.0
    %106 = vmatpush1.msra.mxu0 0.0
    %107 = vmatprep.subr.mxu0 0.0
    %108 = vmatpush1.msra.mxu0 0.0
    %109 = vmatprep.subr.mxu0 0.0
    %110 = vmatpush1.msra.mxu0 0.0
    %111 = vmatprep.subr.mxu0 0.0
    %112 = vmatpush1.msra.mxu0 0.0
    %113 = vmatprep.subr.mxu0 0.0
    %114 = vmatpush1.msra.mxu0 0.0
    %115 = vmatprep.subr.mxu0 0.0
    %116 = vmatpush1.msra.mxu0 0.0
    %117 = vmatprep.subr.mxu0 0.0
    %118 = vmatpush1.msra.mxu0 0.0
    %119 = vmatprep.subr.mxu0 0.0
    %120 = vmatpush1.msra.mxu0 0.0
    %121 = vmatprep.mubr.f32.mxu0 0.0
    %122 = vmatmul.mubr.f32.gmra.mrb[0].mxu0 %v55
    %v123 = vpop.f32.mrb[0].mxu0
    %v124 = vadd.f32 %v51, %v123
    %v125 = vpop.f32.mrb[0].mxu0
    %126 = vdwg.mxu0
    %v127 = vmax.f32 %v124, 0.0
    %129 = vrot.lane.b32.xlu0 %v127, 96
    %v130 = vpop.permute.xlu0 %129
    %v132 = vadd.f32 %v127, %v130
    %v133 = vxor.u32 %v132, 2147483648
    %v134 = vmul.f32 %v133, 1.442695
    %v135 = vpow.pop %v134
    %v136 = vadd.f32 %v135, 1.0
    %v137 = vrcp.pop %v136
    %v138 = vmul.f32 1.0, %v137
    %v139 = vmul.f32 %v138, %v41
    %v140 = vld [vmem:[#allocation2] sm:$0xff]
    %v141 = vld [vmem:[#allocation2 + $0x8] sm:$0xff]
    %v142 = vld [vmem:[#allocation2 + $0x10] sm:$0xff]
    %v143 = vld [vmem:[#allocation2 + $0x18] sm:$0xff]
    %v144 = vld [vmem:[%s4] sm:$0x1]
    %v146 = vlaneseq
    %v147 = vshrl.u32 %v146, 7
    %v148 = vsub.s32 0, %v147
    %v149 = vrot.slane %v144, %v148
    %v152 = vsel %vm53, %v139, 0
    %154 = vmatprep.subr.mxu0 0.0
    %155 = vmatpush1.msra.mxu0 %v140
    %156 = vmatprep.subr.mxu0 0.0
    %157 = vmatpush1.msra.mxu0 %v141
    %158 = vmatprep.subr.mxu0 0.0
    %159 = vmatpush1.msra.mxu0 %v142
    %160 = vmatprep.subr.mxu0 0.0
    %161 = vmatpush1.msra.mxu0 %v143
    %162 = vmatprep.subr.mxu0 0.0
    %163 = vmatpush1.msra.mxu0 0.0
    %164 = vmatprep.subr.mxu0 0.0
    %165 = vmatpush1.msra.mxu0 0.0
    %166 = vmatprep.subr.mxu0 0.0
    %167 = vmatpush1.msra.mxu0 0.0
    %168 = vmatprep.subr.mxu0 0.0
    %169 = vmatpush1.msra.mxu0 0.0
    %170 = vmatprep.subr.mxu0 0.0
    %171 = vmatpush1.msra.mxu0 0.0
    %172 = vmatprep.subr.mxu0 0.0
    %173 = vmatpush1.msra.mxu0 0.0
    %174 = vmatprep.subr.mxu0 0.0
    %175 = vmatpush1.msra.mxu0 0.0
    %176 = vmatprep.subr.mxu0 0.0
    %177 = vmatpush1.msra.mxu0 0.0
    %178 = vmatprep.subr.mxu0 0.0
    %179 = vmatpush1.msra.mxu0 0.0
    %180 = vmatprep.subr.mxu0 0.0
    %181 = vmatpush1.msra.mxu0 0.0
    %182 = vmatprep.subr.mxu0 0.0
    %183 = vmatpush1.msra.mxu0 0.0
    %184 = vmatprep.subr.mxu0 0.0
    %185 = vmatpush1.msra.mxu0 0.0
    %186 = vmatprep.subr.mxu0 0.0
    %187 = vmatpush1.msra.mxu0 0.0
    %188 = vmatprep.subr.mxu0 0.0
    %189 = vmatpush1.msra.mxu0 0.0
    %190 = vmatprep.subr.mxu0 0.0
    %191 = vmatpush1.msra.mxu0 0.0
    %192 = vmatprep.subr.mxu0 0.0
    %193 = vmatpush1.msra.mxu0 0.0
    %194 = vmatprep.subr.mxu0 0.0
    %195 = vmatpush1.msra.mxu0 0.0
    %196 = vmatprep.subr.mxu0 0.0
    %197 = vmatpush1.msra.mxu0 0.0
    %198 = vmatprep.subr.mxu0 0.0
    %199 = vmatpush1.msra.mxu0 0.0
    %200 = vmatprep.subr.mxu0 0.0
    %201 = vmatpush1.msra.mxu0 0.0
    %202 = vmatprep.subr.mxu0 0.0
    %203 = vmatpush1.msra.mxu0 0.0
    %204 = vmatprep.subr.mxu0 0.0
    %205 = vmatpush1.msra.mxu0 0.0
    %206 = vmatprep.subr.mxu0 0.0
    %207 = vmatpush1.msra.mxu0 0.0
    %208 = vmatprep.subr.mxu0 0.0
    %209 = vmatpush1.msra.mxu0 0.0
    %210 = vmatprep.subr.mxu0 0.0
    %211 = vmatpush1.msra.mxu0 0.0
    %212 = vmatprep.subr.mxu0 0.0
    %213 = vmatpush1.msra.mxu0 0.0
    %214 = vmatprep.subr.mxu0 0.0
    %215 = vmatpush1.msra.mxu0 0.0
    %216 = vmatprep.subr.mxu0 0.0
    %217 = vmatpush1.msra.mxu0 0.0
    %218 = vmatprep.mubr.f32.mxu0 0.0
    %219 = vmatmul.mubr.f32.gmra.mrb[0].mxu0 %v152
    %v220 = vpop.f32.mrb[0].mxu0
    %v221 = vadd.f32 %v149, %v220
    %v222 = vpop.f32.mrb[0].mxu0
    %223 = vdwg.mxu0
    %v224 = vmax.f32 %v221, 0.0
    %v225 = vxor.u32 %v224, 2147483648
    %v226 = vmul.f32 %v225, 1.442695
    %v227 = vpow.pop %v226
    %v228 = vadd.f32 %v227, 1.0
    %v229 = vrcp.pop %v228
    %v230 = vmul.f32 1.0, %v229
    %v231 = vmul.f32 %v230, %v139
    %v232 = vadd.f32 %v41, %v231
    %v233 = vld [vmem:[%s5] sm:$0xff]
    %v234 = vld [vmem:[%s5 + $0x8] sm:$0xff]
    %v235 = vld [vmem:[%s5 + $0x10] sm:$0xff]
    %v236 = vld [vmem:[%s5 + $0x18] sm:$0xff]
    %v237 = vld [vmem:[%s6] sm:$0x1]
    %v239 = vlaneseq
    %v240 = vshrl.u32 %v239, 7
    %v241 = vsub.s32 0, %v240
    %v242 = vrot.slane %v237, %v241
    %v245 = vsel %vm53, %v232, 0
    %247 = vmatprep.subr.mxu0 0.0
    %248 = vmatpush1.msra.mxu0 %v233
    %249 = vmatprep.subr.mxu0 0.0
    %250 = vmatpush1.msra.mxu0 %v234
    %251 = vmatprep.subr.mxu0 0.0
    %252 = vmatpush1.msra.mxu0 %v235
    %253 = vmatprep.subr.mxu0 0.0
    %254 = vmatpush1.msra.mxu0 %v236
    %255 = vmatprep.subr.mxu0 0.0
    %256 = vmatpush1.msra.mxu0 0.0
    %257 = vmatprep.subr.mxu0 0.0
    %258 = vmatpush1.msra.mxu0 0.0
    %259 = vmatprep.subr.mxu0 0.0
    %260 = vmatpush1.msra.mxu0 0.0
    %261 = vmatprep.subr.mxu0 0.0
    %262 = vmatpush1.msra.mxu0 0.0
    %263 = vmatprep.subr.mxu0 0.0
    %264 = vmatpush1.msra.mxu0 0.0
    %265 = vmatprep.subr.mxu0 0.0
    %266 = vmatpush1.msra.mxu0 0.0
    %267 = vmatprep.subr.mxu0 0.0
    %268 = vmatpush1.msra.mxu0 0.0
    %269 = vmatprep.subr.mxu0 0.0
    %270 = vmatpush1.msra.mxu0 0.0
    %271 = vmatprep.subr.mxu0 0.0
    %272 = vmatpush1.msra.mxu0 0.0
    %273 = vmatprep.subr.mxu0 0.0
    %274 = vmatpush1.msra.mxu0 0.0
    %275 = vmatprep.subr.mxu0 0.0
    %276 = vmatpush1.msra.mxu0 0.0
    %277 = vmatprep.subr.mxu0 0.0
    %278 = vmatpush1.msra.mxu0 0.0
    %279 = vmatprep.subr.mxu0 0.0
    %280 = vmatpush1.msra.mxu0 0.0
    %281 = vmatprep.subr.mxu0 0.0
    %282 = vmatpush1.msra.mxu0 0.0
    %283 = vmatprep.subr.mxu0 0.0
    %284 = vmatpush1.msra.mxu0 0.0
    %285 = vmatprep.subr.mxu0 0.0
    %286 = vmatpush1.msra.mxu0 0.0
    %287 = vmatprep.subr.mxu0 0.0
    %288 = vmatpush1.msra.mxu0 0.0
    %289 = vmatprep.subr.mxu0 0.0
    %290 = vmatpush1.msra.mxu0 0.0
    %291 = vmatprep.subr.mxu0 0.0
    %292 = vmatpush1.msra.mxu0 0.0
    %293 = vmatprep.subr.mxu0 0.0
    %294 = vmatpush1.msra.mxu0 0.0
    %295 = vmatprep.subr.mxu0 0.0
    %296 = vmatpush1.msra.mxu0 0.0
    %297 = vmatprep.subr.mxu0 0.0
    %298 = vmatpush1.msra.mxu0 0.0
    %299 = vmatprep.subr.mxu0 0.0
    %300 = vmatpush1.msra.mxu0 0.0
    %301 = vmatprep.subr.mxu0 0.0
    %302 = vmatpush1.msra.mxu0 0.0
    %303 = vmatprep.subr.mxu0 0.0
    %304 = vmatpush1.msra.mxu0 0.0
    %305 = vmatprep.subr.mxu0 0.0
    %306 = vmatpush1.msra.mxu0 0.0
    %307 = vmatprep.subr.mxu0 0.0
    %308 = vmatpush1.msra.mxu0 0.0
    %309 = vmatprep.subr.mxu0 0.0
    %310 = vmatpush1.msra.mxu0 0.0
    %311 = vmatprep.mubr.f32.mxu0 0.0
    %312 = vmatmul.mubr.f32.gmra.mrb[0].mxu0 %v245
    %v313 = vpop.f32.mrb[0].mxu0
    %v314 = vadd.f32 %v242, %v313
    %v315 = vpop.f32.mrb[0].mxu0
    %316 = vdwg.mxu0
    %vm317 = vcmask 130048
    %318 = vst.msk [vmem:[#allocation5] sm:$0xff] %vm317, %v314
    // Predicated region
    $region34: #{tpu_custom_call.1} parent=1 // pred_check
      _
    $region35: #{tpu_custom_call.1} parent=1 // pred_check_branch
      %320 = sbr.rel (0) target = $region37
    $region36: #{tpu_custom_call.1} parent=1 // pred_region
      %s322 = ssub.s32 128, 128
      %323 = vsyncadd [#allocation4], %s322
      %s325 = sshll.u32 [#allocation5], 4
      %s326 = int_to_ptr.vmem [resolvable:$true] %s325
      %328 = dma.vmem_to_hbm [thread:$0]  %s326, 128, %s7, [#allocation4]
    $region37: #{tpu_custom_call.1} parent=1 // pred_fallthru
      _
    // Predicated region
    $region38: #{tpu_custom_call.1} parent=1 // pred_check
      _
    $region39: #{tpu_custom_call.1} parent=1 // pred_check_branch
      %330 = sbr.rel (0) target = $region41
    $region40: #{tpu_custom_call.1} parent=1 // pred_region
      %331 = dma.done [#allocation4], 128
    $region41: #{tpu_custom_call.1} parent=1 // pred_fallthru
      _
    %332 = vsyncpa [#allocation3], 1
    %333 = vsyncpa [#allocation4], 1

</llo_original>
